<compile_context>
chip_gen: v7x
topology: tpu7x:2x2x1
jax: 0.10.0
libtpu: 0.0.40
codegen_flags: <defaults>
</compile_context>

<pallas_src>
import functools

import jax
import jax.numpy as jnp
from jax.experimental import pallas as pl
from jax.experimental.pallas import tpu as pltpu


def _mlp_fused_kernel(x_ref, wu_ref, bu_ref, wv_ref, bv_ref, o_ref):
    # x_ref : (1, H, tp)        channels-first slab; lane axis = pixels
    # wu_ref: (L-1, H, H)       stacked U weights, PyTorch (out_ch, in_ch) layout
    # bu_ref: (L-1, H, 1)       stacked U biases (column vectors -> lane bcast)
    # wv_ref: (out, H)          V weight
    # bv_ref: (out, 1)          V bias
    # o_ref : (1, out, tp)      lane-dense output slab
    h = x_ref[0]                                                   # (H, tp)
    n_u = wu_ref.shape[0]                                          # static
    for l in range(n_u):                                           # fused layers
        h = jnp.dot(wu_ref[l], h, preferred_element_type=jnp.float32)
        h = jnp.maximum(h + bu_ref[l], 0.0)                        # bias + ReLU
    y = jnp.dot(wv_ref[...], h, preferred_element_type=jnp.float32)
    o_ref[0] = (y + bv_ref[...]).astype(o_ref.dtype)


def _num_tensorcores():
    """TensorCores per chip: 2 on v7x, 1 on v5e/v6e. Fallback to 1 (safe)."""
    try:
        kind = jax.devices()[0].device_kind.lower()
        if "v7" in kind:
            return 2
    except Exception:  # pragma: no cover - metadata probing only
        pass
    return 1


def _pick_pixel_tile(P, batch, n_tc, max_tile=2048):
    """Pixel (lane) tile size.

    * If P is not a 128-multiple, use the full extent (full-dim blocks are
      exempt from the (8,128) rule) -> no wrapper pad/slice.
    * Otherwise take the largest 128-multiple tile dividing P (cap max_tile).
    * Only on multi-TC chips (v7x), and only when the batch axis alone cannot
      feed all cores, split pixels -- but never below 512 lanes.
    """
    if P % 128 != 0:
        return P
    cap = max_tile
    if n_tc >= 2 and batch < n_tc:
        cap = min(cap, max(512, P // n_tc))
    best = 128
    t = 128
    while t <= min(P, cap):
        if P % t == 0:
            best = t
        t += 128
    return best


@functools.partial(jax.jit, static_argnames=("max_tile",))
def mlp_pallas(x_nchw, wu_stack, bu_stack, wv, bv, *, max_tile=2048):
    """Fused MLP forward.

    x_nchw  : (B, hidden, N, N) f32            (PyTorch NCHW input)
    wu_stack: (L-1, hidden, hidden) f32        stacked U Conv2d weights (1x1 squeezed)
    bu_stack: (L-1, hidden, 1) f32             stacked U biases
    wv      : (out, hidden) f32                V Conv2d weight
    bv      : (out, 1) f32                     V bias
    Returns (B, N, N, out) f32, matching MLP.forward's permute(0, 2, 3, 1).
    """
    B, H, N1, N2 = x_nchw.shape
    n_u = wu_stack.shape[0]
    out_dim = wv.shape[0]
    P = N1 * N2

    # Free, contiguous view: NCHW -> (B, H, N*N).  No HBM rewrite.
    x = x_nchw.reshape(B, H, P)

    n_tc = _num_tensorcores()
    tp = _pick_pixel_tile(P, B, n_tc, max_tile)
    grid = (B, P // tp)

    cost = pl.CostEstimate(
        flops=2 * B * P * H * (n_u * H + out_dim),
        transcendentals=0,
        bytes_accessed=4 * (B * P * (H + out_dim)
                            + n_u * (H * H + H) + out_dim * H + out_dim),
    )

    y_flat = pl.pallas_call(
        _mlp_fused_kernel,
        out_shape=jax.ShapeDtypeStruct((B, out_dim, P), jnp.float32),
        grid_spec=pltpu.PrefetchScalarGridSpec(
            num_scalar_prefetch=0,
            grid=grid,
            in_specs=[
                pl.BlockSpec((1, H, tp), lambda b, p: (b, 0, p)),
                # Constant index_maps: weights/biases stay VMEM-resident
                # across the whole grid (no per-step re-DMA).
                pl.BlockSpec((n_u, H, H), lambda b, p: (0, 0, 0)),
                pl.BlockSpec((n_u, H, 1), lambda b, p: (0, 0, 0)),
                pl.BlockSpec((out_dim, H), lambda b, p: (0, 0)),
                pl.BlockSpec((out_dim, 1), lambda b, p: (0, 0)),
            ],
            out_specs=pl.BlockSpec((1, out_dim, tp), lambda b, p: (b, 0, p)),
        ),
        compiler_params=pltpu.CompilerParams(
            dimension_semantics=("parallel", "parallel"),
        ),
        cost_estimate=cost,
    )(x, wu_stack, bu_stack, wv, bv)

    # Cheap epilogue on the tiny (B, out, P) result to match PyTorch's
    # y.permute(0, 2, 3, 1).  Kept in XLA so the kernel output stays lane-dense;
    # downstream consumers that accept channels-first can take y_flat directly.
    y = y_flat.reshape(B, out_dim, N1, N2)
    return jnp.transpose(y, (0, 2, 3, 1))


def reference_mlp(x_nchw, wu_stack, bu_stack, wv, bv):
    """Pure-JAX reference matching the PyTorch forward exactly."""
    h = x_nchw
    for l in range(wu_stack.shape[0]):
        h = (jnp.einsum("oc,bcij->boij", wu_stack[l], h)
             + bu_stack[l, :, 0][None, :, None, None])
        h = jnp.maximum(h, 0.0)
    y = (jnp.einsum("oc,bcij->boij", wv, h)
         + bv[:, 0][None, :, None, None])
    return jnp.transpose(y, (0, 2, 3, 1))            # (B, N, N, out)


def _make_params(key, hidden_dim, output_dim, L):
    """Conv2d-style init, native PyTorch (out_ch, in_ch) layout, (1,1) squeezed."""
    n_u = L - 1
    keys = jax.random.split(key, 2 * n_u + 2)
    bound = 1.0 / jnp.sqrt(hidden_dim)
    wu = jnp.stack([
        jax.random.uniform(keys[2 * l], (hidden_dim, hidden_dim),
                           minval=-bound, maxval=bound, dtype=jnp.float32)
        for l in range(n_u)])
    bu = jnp.stack([
        jax.random.uniform(keys[2 * l + 1], (hidden_dim, 1),
                           minval=-bound, maxval=bound, dtype=jnp.float32)
        for l in range(n_u)])
    wv = jax.random.uniform(keys[-2], (output_dim, hidden_dim),
                            minval=-bound, maxval=bound, dtype=jnp.float32)
    bv = jax.random.uniform(keys[-1], (output_dim, 1),
                            minval=-bound, maxval=bound, dtype=jnp.float32)
    return wu, bu, wv, bv


if __name__ == "__main__":
    batch = 2
    hidden_dim = 32
    output_dim = 8
    num_nodes = 16

    key = jax.random.PRNGKey(0)
    k_x, k_p2, k_p3 = jax.random.split(key, 3)

    # Input: (batch, hidden_dim, num_nodes, num_nodes), NCHW as in PyTorch.
    x = jax.random.normal(k_x, (batch, hidden_dim, num_nodes, num_nodes),
                          dtype=jnp.float32)

    # Default module config: L=2 -> one fused U layer + V layer.
    wu2, bu2, wv2, bv2 = _make_params(k_p2, hidden_dim, output_dim, L=2)
    y2 = jax.block_until_ready(mlp_pallas(x, wu2, bu2, wv2, bv2))
    y2_ref = reference_mlp(x, wu2, bu2, wv2, bv2)
    assert y2.shape == (batch, num_nodes, num_nodes, output_dim), y2.shape
    assert jnp.allclose(y2, y2_ref, atol=1e-5, rtol=1e-5), \
        float(jnp.max(jnp.abs(y2 - y2_ref)))

    # Deeper config (L=3) exercises the in-kernel fused multi-layer loop.
    wu3, bu3, wv3, bv3 = _make_params(k_p3, hidden_dim, output_dim, L=3)
    y3 = jax.block_until_ready(mlp_pallas(x, wu3, bu3, wv3, bv3))
    y3_ref = reference_mlp(x, wu3, bu3, wv3, bv3)
    assert jnp.allclose(y3, y3_ref, atol=1e-5, rtol=1e-5), \
        float(jnp.max(jnp.abs(y3 - y3_ref)))

    print("KERNEL_OK")
</pallas_src>

<mosaic_0001>
module attributes {stable_mosaic.version = 11 : i64} {
  func.func @_mlp_fused_kernel(%arg0: i32, %arg1: i32, %arg2: memref<1x32x256xf32, #tpu.memory_space<vmem>>, %arg3: memref<1x32x32xf32, #tpu.memory_space<vmem>>, %arg4: memref<1x32x1xf32, #tpu.memory_space<vmem>>, %arg5: memref<8x32xf32, #tpu.memory_space<vmem>>, %arg6: memref<8x1xf32, #tpu.memory_space<vmem>>, %arg7: memref<1x8x256xf32, #tpu.memory_space<vmem>>) attributes {dimension_semantics = [#tpu.dimension_semantics<parallel>, #tpu.dimension_semantics<parallel>], iteration_bounds = array<i64: 2, 1>, scalar_prefetch = 0 : i64, scratch_operands = 0 : i64, tpu.core_type = #tpu.core_type<tc>, window_params = [{transform_indices = @transform_0, window_bounds = array<i64: 1, 32, 256>}, {pipeline_mode = #tpu.pipeline_mode<synchronous>, transform_indices = @transform_1, window_bounds = array<i64: 1, 32, 32>}, {pipeline_mode = #tpu.pipeline_mode<synchronous>, transform_indices = @transform_2, window_bounds = array<i64: 1, 32, 1>}, {pipeline_mode = #tpu.pipeline_mode<synchronous>, transform_indices = @transform_3, window_bounds = array<i64: 8, 32>}, {pipeline_mode = #tpu.pipeline_mode<synchronous>, transform_indices = @transform_4, window_bounds = array<i64: 8, 1>}, {transform_indices = @transform_5, window_bounds = array<i64: 1, 8, 256>}]} {
    %c0 = arith.constant 0 : index
    %c0_0 = arith.constant 0 : index
    %c0_1 = arith.constant 0 : index
    %0 = vector.load %arg2[%c0, %c0_0, %c0_1] : memref<1x32x256xf32, #tpu.memory_space<vmem>>, vector<1x32x256xf32>
    %1 = vector.shape_cast %0 : vector<1x32x256xf32> to vector<32x256xf32>
    %c0_2 = arith.constant 0 : index
    %c0_3 = arith.constant 0 : index
    %c0_4 = arith.constant 0 : index
    %2 = vector.load %arg3[%c0_2, %c0_3, %c0_4] : memref<1x32x32xf32, #tpu.memory_space<vmem>>, vector<1x32x32xf32>
    %3 = vector.shape_cast %2 : vector<1x32x32xf32> to vector<32x32xf32>
    %cst = arith.constant dense<0.000000e+00> : vector<32x256xf32>
    %4 = tpu.matmul %3, %1, %cst {dimension_numbers = #tpu.dot_dimension_numbers<[1], [0], [0], [1], [0, 0, 1, 1], [], []>} : vector<32x32xf32>, vector<32x256xf32>, vector<32x256xf32> -> vector<32x256xf32>
    %c0_5 = arith.constant 0 : index
    %c0_6 = arith.constant 0 : index
    %c0_7 = arith.constant 0 : index
    %5 = vector.load %arg4[%c0_5, %c0_6, %c0_7] : memref<1x32x1xf32, #tpu.memory_space<vmem>>, vector<1x32x1xf32>
    %6 = vector.shape_cast %5 : vector<1x32x1xf32> to vector<32x1xf32>
    %7 = vector.broadcast %6 : vector<32x1xf32> to vector<32x256xf32>
    %8 = arith.addf %4, %7 : vector<32x256xf32>
    %cst_8 = arith.constant 0.000000e+00 : f32
    %9 = vector.broadcast %cst_8 : f32 to vector<32x256xf32>
    %10 = arith.maximumf %8, %9 : vector<32x256xf32>
    %c0_9 = arith.constant 0 : index
    %c0_10 = arith.constant 0 : index
    %11 = vector.load %arg5[%c0_9, %c0_10] : memref<8x32xf32, #tpu.memory_space<vmem>>, vector<8x32xf32>
    %cst_11 = arith.constant dense<0.000000e+00> : vector<8x256xf32>
    %12 = tpu.matmul %11, %10, %cst_11 {dimension_numbers = #tpu.dot_dimension_numbers<[1], [0], [0], [1], [0, 0, 1, 1], [], []>} : vector<8x32xf32>, vector<32x256xf32>, vector<8x256xf32> -> vector<8x256xf32>
    %c0_12 = arith.constant 0 : index
    %c0_13 = arith.constant 0 : index
    %13 = vector.load %arg6[%c0_12, %c0_13] : memref<8x1xf32, #tpu.memory_space<vmem>>, vector<8x1xf32>
    %14 = vector.broadcast %13 : vector<8x1xf32> to vector<8x256xf32>
    %15 = arith.addf %12, %14 : vector<8x256xf32>
    %c0_14 = arith.constant 0 : index
    %c0_15 = arith.constant 0 : index
    %c0_16 = arith.constant 0 : index
    %16 = vector.load %arg7[%c0_14, %c0_15, %c0_16] : memref<1x8x256xf32, #tpu.memory_space<vmem>>, vector<1x8x256xf32>
    %17 = vector.shape_cast %16 : vector<1x8x256xf32> to vector<8x256xf32>
    %18 = vector.shape_cast %15 : vector<8x256xf32> to vector<1x8x256xf32>
    tpu.vector_store %arg7[%c0_14, %c0_15, %c0_16], %18 {strides = array<i32>} : memref<1x8x256xf32, #tpu.memory_space<vmem>>, vector<1x8x256xf32>,
    return
  }
  func.func @transform_0(%arg0: i32, %arg1: i32) -> (i32, i32, i32) {
    %c0_i32 = arith.constant 0 : i32
    %c0_i32_0 = arith.constant 0 : i32
    return %arg0, %c0_i32, %arg1 : i32, i32, i32
  }
  func.func @transform_1(%arg0: i32, %arg1: i32) -> (i32, i32, i32) {
    %c0_i32 = arith.constant 0 : i32
    %c0_i32_0 = arith.constant 0 : i32
    %c0_i32_1 = arith.constant 0 : i32
    %c0_i32_2 = arith.constant 0 : i32
    return %c0_i32, %c0_i32_0, %c0_i32_1 : i32, i32, i32
  }
  func.func @transform_2(%arg0: i32, %arg1: i32) -> (i32, i32, i32) {
    %c0_i32 = arith.constant 0 : i32
    %c0_i32_0 = arith.constant 0 : i32
    %c0_i32_1 = arith.constant 0 : i32
    %c0_i32_2 = arith.constant 0 : i32
    return %c0_i32, %c0_i32_0, %c0_i32_1 : i32, i32, i32
  }
  func.func @transform_3(%arg0: i32, %arg1: i32) -> (i32, i32) {
    %c0_i32 = arith.constant 0 : i32
    %c0_i32_0 = arith.constant 0 : i32
    %c0_i32_1 = arith.constant 0 : i32
    return %c0_i32, %c0_i32_0 : i32, i32
  }
  func.func @transform_4(%arg0: i32, %arg1: i32) -> (i32, i32) {
    %c0_i32 = arith.constant 0 : i32
    %c0_i32_0 = arith.constant 0 : i32
    %c0_i32_1 = arith.constant 0 : i32
    return %c0_i32, %c0_i32_0 : i32, i32
  }
  func.func @transform_5(%arg0: i32, %arg1: i32) -> (i32, i32, i32) {
    %c0_i32 = arith.constant 0 : i32
    %c0_i32_0 = arith.constant 0 : i32
    return %arg0, %c0_i32, %arg1 : i32, i32, i32
  }
}

</mosaic_0001>

<llo_original>
// kernel: mlp_pallas.1
$region0: #{mlp_pallas.1}
  #allocation0 [shape = 'u32[]', space=smem, size = 0x4, offset = 0x4, fixed_abs, tag = 'smem constant byte address 0x4 - core index']
  #allocation1 [shape = 'u32[144,128]{1,0:T(1,128)}', space=vmem, size = 0x12000, scoped, tag = 'internal scratch']
  %s0 = inlined_call_operand.vmem [shape: f32[2,32,256], index: 0, kind: input, shape index: {}]
  %s1 = inlined_call_operand.vmem [shape: f32[1,32,32], index: 1, kind: input, shape index: {}]
  %s2 = inlined_call_operand.vmem [shape: f32[1,32,1], index: 2, kind: input, shape index: {}]
  %s3 = inlined_call_operand.vmem [shape: f32[8,32], index: 3, kind: input, shape index: {}]
  %s4 = inlined_call_operand.vmem [shape: f32[8,1], index: 4, kind: input, shape index: {}]
  %s5 = inlined_call_operand.vmem [shape: f32[2,8,256], index: 5, kind: output, shape index: {}]
  %s6 = sld [smem:[#allocation0]]
  $region53: #{mlp_pallas.1} parent=0
    _
  %s8 = ssub.s32 1, %s6
  %s9 = scalar_select 0, %s8, %s6
  loop: start=0, step=1, limit=4
  $region2: #{mlp_pallas.1} parent=0 // loop_pre_header
    _
  $region3: #{mlp_pallas.1} parent=0 // loop_header
    %s11 = sphi 0, %s15
    %p12 = scmp.ge.s32.totalorder %s11, 4
    %s18 = sphi 0, %s30
    %s19 = sphi 0, %s26
    %s20 = sphi 0, %s18
    %s21 = sphi 0, %s19
    %s22 = sphi 0, %s20
    %s23 = sphi 0, %s21
    %s35 = sphi 0, %s37
    %s38 = sphi 0, %s35
    %s39 = sphi 0, %s38
    %s55 = sphi 0, %s39
    %s59 = sphi 0, %s59
    %s61 = sphi 0, %s59
    %s62 = sphi 0, %s61
    %s76 = sphi 0, %s62
    %s80 = sphi 0, %s80
    %s82 = sphi 0, %s80
    %s83 = sphi 0, %s82
    %s97 = sphi 0, %s83
    %s101 = sphi 0, %s101
    %s103 = sphi 0, %s101
    %s104 = sphi 0, %s103
    %s118 = sphi 0, %s104
    %s122 = sphi 0, %s122
    %s124 = sphi 0, %s122
    %s125 = sphi 0, %s124
    %s139 = sphi 0, %s125
    %s147 = sphi 0, %s149
    %s150 = sphi 0, %s147
    %s151 = sphi 0, %s150
    %s167 = sphi 0, %s151
  $region4: #{mlp_pallas.1} parent=0 // loop_header_branch
    %14 = sbr.rel (%p12) target = $region8
  $region5: #{mlp_pallas.1} parent=0 // loop_body
    %s16 = ssub.s32 %s11, 1
    %s17 = ssub.s32 %s11, 2
    %s24 = sadd.s32 1, %s19
    %p25 = scmp.ge.s32.totalorder %s24, 1
    %s26 = scalar_select %p25, 0, %s24
    %s27 = sadd.s32 1, %s18
    %s28 = scalar_select %p25, %s27, %s18
    %p29 = scmp.ge.s32.totalorder %s28, 2
    %s30 = scalar_select %p29, 0, %s28
    %s31 = ssub.s32 %s18, %s30
    %s32 = ssub.s32 %s19, %s26
    %s33 = sor.u32 %s31, %s32
    %p34 = scmp.eq.s32.totalorder %s33, 0
    %s36 = sadd.s32 %s35, 1
    %s37 = scalar_select %p34, %s35, %s36
    %p40 = pneg %p34
    %p41 = scmp.eq.s32.totalorder %s11, 1
    %p42 = por %p40, %p41
    %p43 = scmp.ne.s32.totalorder %s35, %s38
    %p44 = scmp.eq.s32.totalorder %s11, 0
    %p45 = por %p43, %p44
    %p46 = scmp.ne.s32.totalorder %s35, %s38
    %p47 = scmp.eq.s32.totalorder %s16, 1
    %p48 = por %p46, %p47
    %p49 = scmp.ne.s32.totalorder %s38, %s39
    %p50 = scmp.eq.s32.totalorder %s16, 0
    %p51 = por %p49, %p50
    %p52 = scmp.ne.s32.totalorder %s38, %s39
    %p53 = scmp.eq.s32.totalorder %s17, 1
    %p54 = por %p52, %p53
    %p56 = scmp.ne.s32.totalorder %s39, %s55
    %p57 = scmp.eq.s32.totalorder %s17, 0
    %p58 = por %p56, %p57
    %s60 = sadd.s32 %s59, 1
    %p63 = scmp.eq.s32.totalorder %s11, 1
    %p64 = scmp.ne.s32.totalorder %s59, %s61
    %p65 = scmp.eq.s32.totalorder %s11, 0
    %p66 = por %p64, %p65
    %p67 = scmp.ne.s32.totalorder %s59, %s61
    %p68 = scmp.eq.s32.totalorder %s16, 1
    %p69 = por %p67, %p68
    %p70 = scmp.ne.s32.totalorder %s61, %s62
    %p71 = scmp.eq.s32.totalorder %s16, 0
    %p72 = por %p70, %p71
    %p73 = scmp.ne.s32.totalorder %s61, %s62
    %p74 = scmp.eq.s32.totalorder %s17, 1
    %p75 = por %p73, %p74
    %p77 = scmp.ne.s32.totalorder %s62, %s76
    %p78 = scmp.eq.s32.totalorder %s17, 0
    %p79 = por %p77, %p78
    %s81 = sadd.s32 %s80, 1
    %p84 = scmp.eq.s32.totalorder %s11, 1
    %p85 = scmp.ne.s32.totalorder %s80, %s82
    %p86 = scmp.eq.s32.totalorder %s11, 0
    %p87 = por %p85, %p86
    %p88 = scmp.ne.s32.totalorder %s80, %s82
    %p89 = scmp.eq.s32.totalorder %s16, 1
    %p90 = por %p88, %p89
    %p91 = scmp.ne.s32.totalorder %s82, %s83
    %p92 = scmp.eq.s32.totalorder %s16, 0
    %p93 = por %p91, %p92
    %p94 = scmp.ne.s32.totalorder %s82, %s83
    %p95 = scmp.eq.s32.totalorder %s17, 1
    %p96 = por %p94, %p95
    %p98 = scmp.ne.s32.totalorder %s83, %s97
    %p99 = scmp.eq.s32.totalorder %s17, 0
    %p100 = por %p98, %p99
    %s102 = sadd.s32 %s101, 1
    %p105 = scmp.eq.s32.totalorder %s11, 1
    %p106 = scmp.ne.s32.totalorder %s101, %s103
    %p107 = scmp.eq.s32.totalorder %s11, 0
    %p108 = por %p106, %p107
    %p109 = scmp.ne.s32.totalorder %s101, %s103
    %p110 = scmp.eq.s32.totalorder %s16, 1
    %p111 = por %p109, %p110
    %p112 = scmp.ne.s32.totalorder %s103, %s104
    %p113 = scmp.eq.s32.totalorder %s16, 0
    %p114 = por %p112, %p113
    %p115 = scmp.ne.s32.totalorder %s103, %s104
    %p116 = scmp.eq.s32.totalorder %s17, 1
    %p117 = por %p115, %p116
    %p119 = scmp.ne.s32.totalorder %s104, %s118
    %p120 = scmp.eq.s32.totalorder %s17, 0
    %p121 = por %p119, %p120
    %s123 = sadd.s32 %s122, 1
    %p126 = scmp.eq.s32.totalorder %s11, 1
    %p127 = scmp.ne.s32.totalorder %s122, %s124
    %p128 = scmp.eq.s32.totalorder %s11, 0
    %p129 = por %p127, %p128
    %p130 = scmp.ne.s32.totalorder %s122, %s124
    %p131 = scmp.eq.s32.totalorder %s16, 1
    %p132 = por %p130, %p131
    %p133 = scmp.ne.s32.totalorder %s124, %s125
    %p134 = scmp.eq.s32.totalorder %s16, 0
    %p135 = por %p133, %p134
    %p136 = scmp.ne.s32.totalorder %s124, %s125
    %p137 = scmp.eq.s32.totalorder %s17, 1
    %p138 = por %p136, %p137
    %p140 = scmp.ne.s32.totalorder %s125, %s139
    %p141 = scmp.eq.s32.totalorder %s17, 0
    %p142 = por %p140, %p141
    %s143 = ssub.s32 %s18, %s30
    %s144 = ssub.s32 %s19, %s26
    %s145 = sor.u32 %s143, %s144
    %p146 = scmp.eq.s32.totalorder %s145, 0
    %s148 = sadd.s32 %s147, 1
    %s149 = scalar_select %p146, %s147, %s148
    %p152 = pneg %p146
    %p153 = scmp.eq.s32.totalorder %s11, 1
    %p154 = por %p152, %p153
    %p155 = scmp.ne.s32.totalorder %s147, %s150
    %p156 = scmp.eq.s32.totalorder %s11, 0
    %p157 = por %p155, %p156
    %p158 = scmp.ne.s32.totalorder %s147, %s150
    %p159 = scmp.eq.s32.totalorder %s16, 1
    %p160 = por %p158, %p159
    %p161 = scmp.ne.s32.totalorder %s150, %s151
    %p162 = scmp.eq.s32.totalorder %s16, 0
    %p163 = por %p161, %p162
    %p164 = scmp.ne.s32.totalorder %s150, %s151
    %p165 = scmp.eq.s32.totalorder %s17, 1
    %p166 = por %p164, %p165
    %p168 = scmp.ne.s32.totalorder %s151, %s167
    %p169 = scmp.eq.s32.totalorder %s17, 0
    %p170 = por %p168, %p169
    %p171 = scmp.le.s32.totalorder 1, %s11
    %p172 = scmp.lt.s32.totalorder %s11, 3
    %p173 = pnand %p171, %p172
    %p174 = pneg %p173
    // Predicated region
    $region9: #{mlp_pallas.1} parent=5 // pred_check
      _
    $region10: #{mlp_pallas.1} parent=5 // pred_check_branch
      %176 = sbr.rel (%p173) target = $region12
    $region11: #{mlp_pallas.1} parent=5 // pred_region
      %s177 = ssub.s32 %s11, 1
      // Predicated region
      $region13: #{mlp_pallas.1} parent=11 // pred_check
        %p178 = pneg %p72
      $region14: #{mlp_pallas.1} parent=11 // pred_check_branch
        %180 = sbr.rel (%p178) target = $region16
      $region15: #{mlp_pallas.1} parent=11 // pred_region
        _
      $region16: #{mlp_pallas.1} parent=11 // pred_fallthru
        _
      // Predicated region
      $region17: #{mlp_pallas.1} parent=11 // pred_check
        %p181 = pneg %p93
      $region18: #{mlp_pallas.1} parent=11 // pred_check_branch
        %183 = sbr.rel (%p181) target = $region20
      $region19: #{mlp_pallas.1} parent=11 // pred_region
        _
      $region20: #{mlp_pallas.1} parent=11 // pred_fallthru
        _
      // Predicated region
      $region21: #{mlp_pallas.1} parent=11 // pred_check
        %p184 = pneg %p114
      $region22: #{mlp_pallas.1} parent=11 // pred_check_branch
        %186 = sbr.rel (%p184) target = $region24
      $region23: #{mlp_pallas.1} parent=11 // pred_region
        _
      $region24: #{mlp_pallas.1} parent=11 // pred_fallthru
        _
      // Predicated region
      $region25: #{mlp_pallas.1} parent=11 // pred_check
        %p187 = pneg %p135
      $region26: #{mlp_pallas.1} parent=11 // pred_check_branch
        %189 = sbr.rel (%p187) target = $region28
      $region27: #{mlp_pallas.1} parent=11 // pred_region
        _
      $region28: #{mlp_pallas.1} parent=11 // pred_fallthru
        _
    $region12: #{mlp_pallas.1} parent=5 // pred_fallthru
      _
    %p190 = scmp.lt.s32.totalorder %s11, 2
    // Predicated region
    $region29: #{mlp_pallas.1} parent=5 // pred_check
      %p191 = pneg %p190
    $region30: #{mlp_pallas.1} parent=5 // pred_check_branch
      %193 = sbr.rel (%p191) target = $region32
    $region31: #{mlp_pallas.1} parent=5 // pred_region
      // Predicated region
      $region33: #{mlp_pallas.1} parent=31 // pred_check
        %p194 = pneg %p45
      $region34: #{mlp_pallas.1} parent=31 // pred_check_branch
        %196 = sbr.rel (%p194) target = $region36
      $region35: #{mlp_pallas.1} parent=31 // pred_region
        %s197 = smul.u32 2, %s19
        %p198 = scmp.lt.s32.totalorder %s18, 1
        %s199 = scalar_select %p198, %s18, 1
        %p200 = scmp.lt.s32.totalorder %s197, 1
        %s201 = scalar_select %p200, %s197, 1
        %s202 = smul.addr %s199, 8
        %s203 = sadd.s32 %s201, %s202
        %s204 = smul.addr %s203, 8
        %s205 = scalar_lea.vmem %s0, %s204
        %s206 = smul.u32 2, %s19
      $region36: #{mlp_pallas.1} parent=31 // pred_fallthru
        _
    $region32: #{mlp_pallas.1} parent=5 // pred_fallthru
      _
    %p207 = scmp.le.s32.totalorder 1, %s11
    %p208 = scmp.lt.s32.totalorder %s11, 3
    %p209 = pnand %p207, %p208
    %p210 = pneg %p209
    // Predicated region
    $region37: #{mlp_pallas.1} parent=5 // pred_check
      _
    $region38: #{mlp_pallas.1} parent=5 // pred_check_branch
      %212 = sbr.rel (%p209) target = $region40
    $region39: #{mlp_pallas.1} parent=5 // pred_region
      %s213 = ssub.s32 %s11, 1
      %s214 = smul.u32 2, %s21
      %p215 = scmp.lt.s32.totalorder %s20, 1
      %s216 = scalar_select %p215, %s20, 1
      %p217 = scmp.lt.s32.totalorder %s214, 1
      %s218 = scalar_select %p217, %s214, 1
      %s219 = smul.addr %s216, 8
      %s220 = sadd.s32 %s218, %s219
      %s221 = smul.addr %s220, 8
      %s222 = scalar_lea.vmem %s0, %s221
      %p223 = pneg %p51
      %p224 = pneg %p48
      %p225 = pneg %p72
      %p226 = pneg %p69
      %p227 = pneg %p93
      %p228 = pneg %p90
      %p229 = pneg %p114
      %p230 = pneg %p111
      %p231 = pneg %p135
      %p232 = pneg %p132
      %p233 = pneg %p163
      %p234 = pneg %p160
      %s235 = smul.u32 2, %s21
      %p236 = scmp.lt.s32.totalorder %s20, 1
      %s237 = scalar_select %p236, %s20, 1
      %p238 = scmp.lt.s32.totalorder %s235, 1
      %s239 = scalar_select %p238, %s235, 1
      %s240 = smul.addr %s237, 2
      %s241 = sadd.s32 %s239, %s240
      %s242 = smul.addr %s241, 8
      %s243 = scalar_lea.vmem %s5, %s242
      %s244 = smul.u32 2, %s21
      %p245 = scmp.lt.s32.totalorder %s20, 1
      %s246 = scalar_select %p245, %s20, 1
      %p247 = scmp.lt.s32.totalorder %s244, 1
      %s248 = scalar_select %p247, %s244, 1
      %s249 = smul.addr %s246, 8
      %s250 = sadd.s32 %s248, %s249
      %s251 = smul.addr %s250, 8
      %s252 = scalar_lea.vmem %s0, %s251
      %s253 = smul.u32 2, %s21
      %s254 = smul.u32 2, %s21
      %p255 = scmp.lt.s32.totalorder %s20, 1
      %s256 = scalar_select %p255, %s20, 1
      %p257 = scmp.lt.s32.totalorder %s254, 1
      %s258 = scalar_select %p257, %s254, 1
      %s259 = smul.addr %s256, 2
      %s260 = sadd.s32 %s258, %s259
      %s261 = smul.addr %s260, 8
      %s262 = scalar_lea.vmem %s5, %s261
      %s263 = smul.u32 2, %s21
      %v264 = vld [vmem:[%s252] sm:$0xff]
      %v265 = vld [vmem:[%s252 + $0x8] sm:$0xff]
      %v266 = vld [vmem:[%s252 + $0x10] sm:$0xff]
      %v267 = vld [vmem:[%s252 + $0x18] sm:$0xff]
      %v268 = vld [vmem:[%s252 + $0x20] sm:$0xff]
      %v269 = vld [vmem:[%s252 + $0x28] sm:$0xff]
      %v270 = vld [vmem:[%s252 + $0x30] sm:$0xff]
      %v271 = vld [vmem:[%s252 + $0x38] sm:$0xff]
      %v272 = vld [vmem:[%s1] sm:$0xff]
      %v273 = vld [vmem:[%s1 + $0x8] sm:$0xff]
      %v274 = vld [vmem:[%s1 + $0x10] sm:$0xff]
      %v275 = vld [vmem:[%s1 + $0x18] sm:$0xff]
      %v276 = vld [vmem:[%s2] sm:$0xff]
      %v277 = vld [vmem:[%s2 + $0x8] sm:$0xff]
      %v278 = vld [vmem:[%s2 + $0x10] sm:$0xff]
      %v279 = vld [vmem:[%s2 + $0x18] sm:$0xff]
      %281 = vset.pattern.permute.xlu0 0
      %282 = vperm.xlu0 %281, %v276
      %v283 = vpop.permute.xlu0 %282
      %286 = vset.pattern.permute.xlu0 0
      %287 = vperm.xlu0 %286, %v277
      %v288 = vpop.permute.xlu0 %287
      %291 = vset.pattern.permute.xlu0 0
      %292 = vperm.xlu0 %291, %v278
      %v293 = vpop.permute.xlu0 %292
      %296 = vset.pattern.permute.xlu0 0
      %297 = vperm.xlu0 %296, %v279
      %v298 = vpop.permute.xlu0 %297
      %vm300 = vcmask 261120
      %v302 = vsel %vm300, %v272, 0
      %v305 = vsel %vm300, %v273, 0
      %v308 = vsel %vm300, %v274, 0
      %v311 = vsel %vm300, %v275, 0
      %313 = vmatprep.subr.mxu0 %v265
      %314 = vmatpush1.msra.mxu0 %v264
      %315 = vmatprep.subr.mxu0 %v267
      %316 = vmatpush1.msra.mxu0 %v266
      %317 = vmatprep.subr.mxu0 %v269
      %318 = vmatpush1.msra.mxu0 %v268
      %319 = vmatprep.subr.mxu0 %v271
      %320 = vmatpush1.msra.mxu0 %v270
      %321 = vmatprep.subr.mxu0 0.0
      %322 = vmatpush1.msra.mxu0 0.0
      %323 = vmatprep.subr.mxu0 0.0
      %324 = vmatpush1.msra.mxu0 0.0
      %325 = vmatprep.subr.mxu0 0.0
      %326 = vmatpush1.msra.mxu0 0.0
      %327 = vmatprep.subr.mxu0 0.0
      %328 = vmatpush1.msra.mxu0 0.0
      %329 = vmatprep.subr.mxu0 0.0
      %330 = vmatpush1.msra.mxu0 0.0
      %331 = vmatprep.subr.mxu0 0.0
      %332 = vmatpush1.msra.mxu0 0.0
      %333 = vmatprep.subr.mxu0 0.0
      %334 = vmatpush1.msra.mxu0 0.0
      %335 = vmatprep.subr.mxu0 0.0
      %336 = vmatpush1.msra.mxu0 0.0
      %337 = vmatprep.subr.mxu0 0.0
      %338 = vmatpush1.msra.mxu0 0.0
      %339 = vmatprep.subr.mxu0 0.0
      %340 = vmatpush1.msra.mxu0 0.0
      %341 = vmatprep.subr.mxu0 0.0
      %342 = vmatpush1.msra.mxu0 0.0
      %343 = vmatprep.subr.mxu0 0.0
      %344 = vmatpush1.msra.mxu0 0.0
      %345 = vmatprep.subr.mxu0 0.0
      %346 = vmatpush1.msra.mxu0 0.0
      %347 = vmatprep.subr.mxu0 0.0
      %348 = vmatpush1.msra.mxu0 0.0
      %349 = vmatprep.subr.mxu0 0.0
      %350 = vmatpush1.msra.mxu0 0.0
      %351 = vmatprep.subr.mxu0 0.0
      %352 = vmatpush1.msra.mxu0 0.0
      %353 = vmatprep.subr.mxu0 0.0
      %354 = vmatpush1.msra.mxu0 0.0
      %355 = vmatprep.subr.mxu0 0.0
      %356 = vmatpush1.msra.mxu0 0.0
      %357 = vmatprep.subr.mxu0 0.0
      %358 = vmatpush1.msra.mxu0 0.0
      %359 = vmatprep.subr.mxu0 0.0
      %360 = vmatpush1.msra.mxu0 0.0
      %361 = vmatprep.subr.mxu0 0.0
      %362 = vmatpush1.msra.mxu0 0.0
      %363 = vmatprep.subr.mxu0 0.0
      %364 = vmatpush1.msra.mxu0 0.0
      %365 = vmatprep.subr.mxu0 0.0
      %366 = vmatpush1.msra.mxu0 0.0
      %367 = vmatprep.subr.mxu0 0.0
      %368 = vmatpush1.msra.mxu0 0.0
      %369 = vmatprep.subr.mxu0 0.0
      %370 = vmatpush1.msra.mxu0 0.0
      %371 = vmatprep.subr.mxu0 0.0
      %372 = vmatpush1.msra.mxu0 0.0
      %373 = vmatprep.subr.mxu0 0.0
      %374 = vmatpush1.msra.mxu0 0.0
      %375 = vmatprep.subr.mxu0 0.0
      %376 = vmatpush1.msra.mxu0 0.0
      %377 = vmatprep.mubr.f32.mxu0 0.0
      %378 = vmatmul.mubr.f32.gmra.mrb[0].mxu0 %v302
      %v379 = vpop.f32.mrb[0].mxu0
      %v380 = vadd.f32 %v283, %v379
      %v381 = vpop.f32.mrb[0].mxu0
      %v382 = vadd.f32 %v283, %v381
      %383 = vmatprep.mubr.f32.mxu0 0.0
      %384 = vmatmul.mubr.f32.gmra.mrb[0].mxu0 %v305
      %v385 = vpop.f32.mrb[0].mxu0
      %v386 = vadd.f32 %v288, %v385
      %v387 = vpop.f32.mrb[0].mxu0
      %v388 = vadd.f32 %v288, %v387
      %389 = vmatprep.mubr.f32.mxu0 0.0
      %390 = vmatmul.mubr.f32.gmra.mrb[0].mxu0 %v308
      %v391 = vpop.f32.mrb[0].mxu0
      %v392 = vadd.f32 %v293, %v391
      %v393 = vpop.f32.mrb[0].mxu0
      %v394 = vadd.f32 %v293, %v393
      %395 = vmatprep.mubr.f32.mxu0 0.0
      %396 = vmatmul.mubr.f32.gmra.mrb[0].mxu0 %v311
      %v397 = vpop.f32.mrb[0].mxu0
      %v398 = vadd.f32 %v298, %v397
      %v399 = vpop.f32.mrb[0].mxu0
      %v400 = vadd.f32 %v298, %v399
      %401 = vdwg.mxu0
      %v402 = vmax.f32 %v380, 0.0
      %v403 = vmax.f32 %v382, 0.0
      %v404 = vmax.f32 %v386, 0.0
      %v405 = vmax.f32 %v388, 0.0
      %v406 = vmax.f32 %v392, 0.0
      %v407 = vmax.f32 %v394, 0.0
      %v408 = vmax.f32 %v398, 0.0
      %v409 = vmax.f32 %v400, 0.0
      %v410 = vld [vmem:[%s3] sm:$0xff]
      %v411 = vld [vmem:[%s4] sm:$0xff]
      %413 = vset.pattern.permute.xlu0 0
      %414 = vperm.xlu0 %413, %v411
      %v415 = vpop.permute.xlu0 %414
      %v418 = vsel %vm300, %v410, 0
      %420 = vmatprep.subr.mxu0 %v403
      %421 = vmatpush1.msra.mxu0 %v402
      %422 = vmatprep.subr.mxu0 %v405
      %423 = vmatpush1.msra.mxu0 %v404
      %424 = vmatprep.subr.mxu0 %v407
      %425 = vmatpush1.msra.mxu0 %v406
      %426 = vmatprep.subr.mxu0 %v409
      %427 = vmatpush1.msra.mxu0 %v408
      %428 = vmatprep.subr.mxu0 0.0
      %429 = vmatpush1.msra.mxu0 0.0
      %430 = vmatprep.subr.mxu0 0.0
      %431 = vmatpush1.msra.mxu0 0.0
      %432 = vmatprep.subr.mxu0 0.0
      %433 = vmatpush1.msra.mxu0 0.0
      %434 = vmatprep.subr.mxu0 0.0
      %435 = vmatpush1.msra.mxu0 0.0
      %436 = vmatprep.subr.mxu0 0.0
      %437 = vmatpush1.msra.mxu0 0.0
      %438 = vmatprep.subr.mxu0 0.0
      %439 = vmatpush1.msra.mxu0 0.0
      %440 = vmatprep.subr.mxu0 0.0
      %441 = vmatpush1.msra.mxu0 0.0
      %442 = vmatprep.subr.mxu0 0.0
      %443 = vmatpush1.msra.mxu0 0.0
      %444 = vmatprep.subr.mxu0 0.0
      %445 = vmatpush1.msra.mxu0 0.0
      %446 = vmatprep.subr.mxu0 0.0
      %447 = vmatpush1.msra.mxu0 0.0
      %448 = vmatprep.subr.mxu0 0.0
      %449 = vmatpush1.msra.mxu0 0.0
      %450 = vmatprep.subr.mxu0 0.0
      %451 = vmatpush1.msra.mxu0 0.0
      %452 = vmatprep.subr.mxu0 0.0
      %453 = vmatpush1.msra.mxu0 0.0
      %454 = vmatprep.subr.mxu0 0.0
      %455 = vmatpush1.msra.mxu0 0.0
      %456 = vmatprep.subr.mxu0 0.0
      %457 = vmatpush1.msra.mxu0 0.0
      %458 = vmatprep.subr.mxu0 0.0
      %459 = vmatpush1.msra.mxu0 0.0
      %460 = vmatprep.subr.mxu0 0.0
      %461 = vmatpush1.msra.mxu0 0.0
      %462 = vmatprep.subr.mxu0 0.0
      %463 = vmatpush1.msra.mxu0 0.0
      %464 = vmatprep.subr.mxu0 0.0
      %465 = vmatpush1.msra.mxu0 0.0
      %466 = vmatprep.subr.mxu0 0.0
      %467 = vmatpush1.msra.mxu0 0.0
      %468 = vmatprep.subr.mxu0 0.0
      %469 = vmatpush1.msra.mxu0 0.0
      %470 = vmatprep.subr.mxu0 0.0
      %471 = vmatpush1.msra.mxu0 0.0
      %472 = vmatprep.subr.mxu0 0.0
      %473 = vmatpush1.msra.mxu0 0.0
      %474 = vmatprep.subr.mxu0 0.0
      %475 = vmatpush1.msra.mxu0 0.0
      %476 = vmatprep.subr.mxu0 0.0
      %477 = vmatpush1.msra.mxu0 0.0
      %478 = vmatprep.subr.mxu0 0.0
      %479 = vmatpush1.msra.mxu0 0.0
      %480 = vmatprep.subr.mxu0 0.0
      %481 = vmatpush1.msra.mxu0 0.0
      %482 = vmatprep.subr.mxu0 0.0
      %483 = vmatpush1.msra.mxu0 0.0
      %484 = vmatprep.mubr.f32.mxu0 0.0
      %485 = vmatmul.mubr.f32.gmra.mrb[0].mxu0 %v418
      %v486 = vpop.f32.mrb[0].mxu0
      %v487 = vadd.f32 %v415, %v486
      %v488 = vpop.f32.mrb[0].mxu0
      %v489 = vadd.f32 %v415, %v488
      %490 = vdwg.mxu0
      %491 = vst [vmem:[%s262] sm:$0xff] %v487
      %492 = vst [vmem:[%s262 + $0x8] sm:$0xff] %v489
      %s493 = smul.u32 2, %s21
      %p494 = scmp.lt.s32.totalorder %s20, 1
      %s495 = scalar_select %p494, %s20, 1
      %p496 = scmp.lt.s32.totalorder %s493, 1
      %s497 = scalar_select %p496, %s493, 1
      %s498 = smul.addr %s495, 2
      %s499 = sadd.s32 %s497, %s498
      %s500 = smul.addr %s499, 8
      %s501 = scalar_lea.vmem %s5, %s500
      // Predicated region
      $region41: #{mlp_pallas.1} parent=39 // pred_check
        %p502 = pneg %p160
      $region42: #{mlp_pallas.1} parent=39 // pred_check_branch
        %504 = sbr.rel (%p502) target = $region44
      $region43: #{mlp_pallas.1} parent=39 // pred_region
        %s505 = smul.u32 2, %s21
      $region44: #{mlp_pallas.1} parent=39 // pred_fallthru
        _
    $region40: #{mlp_pallas.1} parent=5 // pred_fallthru
      _
    %p506 = scmp.le.s32.totalorder 2, %s11
    // Predicated region
    $region45: #{mlp_pallas.1} parent=5 // pred_check
      %p507 = pneg %p506
    $region46: #{mlp_pallas.1} parent=5 // pred_check_branch
      %509 = sbr.rel (%p507) target = $region48
    $region47: #{mlp_pallas.1} parent=5 // pred_region
      %s510 = ssub.s32 %s11, 2
      // Predicated region
      $region49: #{mlp_pallas.1} parent=47 // pred_check
        %p511 = pneg %p166
      $region50: #{mlp_pallas.1} parent=47 // pred_check_branch
        %513 = sbr.rel (%p511) target = $region52
      $region51: #{mlp_pallas.1} parent=47 // pred_region
        %s514 = smul.u32 2, %s23
        %p515 = scmp.lt.s32.totalorder %s22, 1
        %s516 = scalar_select %p515, %s22, 1
        %p517 = scmp.lt.s32.totalorder %s514, 1
        %s518 = scalar_select %p517, %s514, 1
        %s519 = smul.addr %s516, 2
        %s520 = sadd.s32 %s518, %s519
        %s521 = smul.addr %s520, 8
        %s522 = scalar_lea.vmem %s5, %s521
      $region52: #{mlp_pallas.1} parent=47 // pred_fallthru
        _
    $region48: #{mlp_pallas.1} parent=5 // pred_fallthru
      _
  $region6: #{mlp_pallas.1} parent=0 // loop_footer
    %s15 = sadd.s32 1, %s11
  $region7: #{mlp_pallas.1} parent=0 // loop_footer_branch
    %10 = sbr.rel target = $region3
  $region8: #{mlp_pallas.1} parent=0 // loop_exit
    _

</llo_original>
